<compile_context>
chip_gen: v6e
topology: v6e:2x2x1
jax: 0.10.0
libtpu: 0.0.40
codegen_flags: <defaults>
</compile_context>

<pallas_src>
import numpy as np
import jax
import jax.numpy as jnp
from jax.experimental import pallas as pl

# ---- small, module-consistent config ---------------------------------------------------
B = 2                # batch
C = 32               # backbone.num_channels
D = 32               # transformer.d_model (hidden_dim)
H_SP, W_SP = 4, 8    # backbone feature map -> L = 32 (divisible by 16 for the rearrange)
L = H_SP * W_SP
Q = 8                # num_queries
NUM_CLASSES = 3      # class head outputs NUM_CLASSES + 1 = 4
NC1 = NUM_CLASSES + 1
N = B * Q            # 16
BL = B * L           # 64
OUT_PAD = 128        # lane-dense width of slab and output

# ---- slab row layout (every section starts on an 8-row boundary) -----------------------
R_GAMMA = 0                 # (1, C)    LayerNorm gamma
R_BETA = 8                  # (1, C)    LayerNorm beta
R_POOL = 16                 # (N, BL)   per-batch mean-pool matrix
R_WB1 = 32                  # (C, D)    conv_w.T @ w1.T
R_BB1 = 64                  # (N, D)    (query_embed + conv_b) @ w1.T + b1
R_WC = 80                   # (C, 128)  conv_w.T @ wc.T  at lanes 0:NC1
R_BC = 112                  # (N, 128)  (query_embed + conv_b) @ wc.T + bc at lanes 0:NC1
R_W2 = 128                  # (D, D)    w2.T
R_B2 = 160                  # (1, D)    b2
R_W3 = 168                  # (D, 128)  w3.T at lanes NC1:NC1+4
R_B3 = 200                  # (1, 128)  b3   at lanes NC1:NC1+4
SLAB_ROWS = 208


# ---- fused kernel ----------------------------------------------------------------------
def rftr_fused_kernel(src_ref, slab_ref, out_ref):
    # src_ref:  (B*L, C) channels-last backbone features
    # slab_ref: (SLAB_ROWS, 128) packed constants (see layout above)
    # out_ref:  (N, 128)  lanes 0:NC1 = logits, lanes NC1:NC1+4 = sigmoid(boxes), rest 0

    # --- input_proj LayerNorm(channels_first, eps=1e-6) over C (channels on lanes) ---
    x = src_ref[...]
    gamma = slab_ref[R_GAMMA:R_GAMMA + 1, :C]                        # (1, C)
    beta = slab_ref[R_BETA:R_BETA + 1, :C]                           # (1, C)
    mean = jnp.mean(x, axis=1, keepdims=True)                        # (BL, 1)
    xc = x - mean
    var = jnp.mean(xc * xc, axis=1, keepdims=True)                   # biased var
    xn = gamma * (xc * jax.lax.rsqrt(var + 1e-6)) + beta             # (BL, C)

    # --- TODO(synk): transformer is an external module; deterministic stand-in:
    #     mean-pool over all L positions per batch (kept as one MXU pass), query embed
    #     and the 1x1 conv are pre-folded into the head weights below ---
    pool = slab_ref[R_POOL:R_POOL + N, :BL]                          # (N, BL)
    pmean = jnp.dot(pool, xn, preferred_element_type=jnp.float32)    # (N, C)

    # --- heads (conv + query-embed + biases pre-folded into weights) ---
    h1 = jnp.maximum(
        jnp.dot(pmean, slab_ref[R_WB1:R_WB1 + C, :D],
                preferred_element_type=jnp.float32)
        + slab_ref[R_BB1:R_BB1 + N, :D], 0.0)                        # (N, D)
    cls128 = (jnp.dot(pmean, slab_ref[R_WC:R_WC + C, :],
                      preferred_element_type=jnp.float32)
              + slab_ref[R_BC:R_BC + N, :])                          # (N,128) cls at 0:NC1
    h2 = jnp.maximum(
        jnp.dot(h1, slab_ref[R_W2:R_W2 + D, :D],
                preferred_element_type=jnp.float32)
        + slab_ref[R_B2:R_B2 + 1, :D], 0.0)                          # (N, D)
    box128 = (jnp.dot(h2, slab_ref[R_W3:R_W3 + D, :],
                      preferred_element_type=jnp.float32)
              + slab_ref[R_B3:R_B3 + 1, :])                          # (N,128) box at NC1:NC1+4

    # --- single lane-dense store: select box lanes, keep cls lanes, pad lanes stay 0 ---
    lane = jax.lax.broadcasted_iota(jnp.int32, (N, OUT_PAD), 1)
    is_box = jnp.logical_and(lane >= NC1, lane < NC1 + 4)
    out_ref[...] = jnp.where(is_box, jax.nn.sigmoid(box128), cls128)


def rftr_fused_pallas(src_lc, slab):
    # No grid, no index maps: full arrays land in VMEM, one invocation, no pipeline.
    return pl.pallas_call(
        rftr_fused_kernel,
        out_shape=jax.ShapeDtypeStruct((N, OUT_PAD), jnp.float32),
    )(src_lc, slab)


# ---- one-time parameter preparation: fold + pack into a single lane-dense slab ---------
def prepare_params(p):
    hp = jax.lax.Precision.HIGHEST
    conv_wt = p["conv_w"].T                                          # (C, D)
    conv_b = p["conv_b"].reshape(1, D)                               # (1, D)
    qrep = jnp.tile(p["query_embed"], (B, 1))                        # (N, D), row n = (b, q)
    hs_bias = qrep + conv_b                                          # x-independent part of hs

    wb1 = jnp.dot(conv_wt, p["w1"].T, precision=hp)                  # (C, D)
    bb1 = jnp.dot(hs_bias, p["w1"].T, precision=hp) + p["b1"].reshape(1, D)   # (N, D)
    wcf = jnp.dot(conv_wt, p["wc"].T, precision=hp)                  # (C, NC1)
    bcf = jnp.dot(hs_bias, p["wc"].T, precision=hp) + p["bc"].reshape(1, NC1)  # (N, NC1)

    rows = jnp.arange(N)[:, None] // Q
    cols = jnp.arange(BL)[None, :] // L
    pool = jnp.where(rows == cols, 1.0 / L, 0.0).astype(jnp.float32)  # (N, BL)

    slab = jnp.zeros((SLAB_ROWS, OUT_PAD), jnp.float32)
    slab = slab.at[R_GAMMA, :C].set(p["ln_gamma"].reshape(C))
    slab = slab.at[R_BETA, :C].set(p["ln_beta"].reshape(C))
    slab = slab.at[R_POOL:R_POOL + N, :BL].set(pool)
    slab = slab.at[R_WB1:R_WB1 + C, :D].set(wb1)
    slab = slab.at[R_BB1:R_BB1 + N, :D].set(bb1)
    slab = slab.at[R_WC:R_WC + C, :NC1].set(wcf)
    slab = slab.at[R_BC:R_BC + N, :NC1].set(bcf)
    slab = slab.at[R_W2:R_W2 + D, :D].set(p["w2"].T)
    slab = slab.at[R_B2, :D].set(p["b2"])
    slab = slab.at[R_W3:R_W3 + D, NC1:NC1 + 4].set(p["w3"].T)
    slab = slab.at[R_B3, NC1:NC1 + 4].set(p["b3"])
    return slab


# ---- full forward ----------------------------------------------------------------------
def rftr_forward(src_cl, slab):
    # src_cl: (B, L, C) channels-last backbone features -> free reshape to one lane-dense
    # (B*L, C) tile (no transpose on the forward path).
    out = rftr_fused_pallas(src_cl.reshape(BL, C), slab)             # (N, 128)
    cls = out[:, :NC1].reshape(B, Q, NC1)
    box = out[:, NC1:NC1 + 4].reshape(B, Q, 4)
    return {"pred_logits": cls, "pred_boxes": box}


# ---- plain-JAX reference for verification (follows the original channels-first path) ---
def rftr_reference(src_cf, p):
    x = src_cf                                                       # (B, C, L)
    u = jnp.mean(x, axis=1, keepdims=True)
    s = jnp.mean((x - u) ** 2, axis=1, keepdims=True)
    xn = (x - u) / jnp.sqrt(s + 1e-6)
    xn = p["ln_gamma"][None, :, :] * xn + p["ln_beta"][None, :, :]
    proj = jnp.einsum("dc,bcl->bdl", p["conv_w"], xn) + p["conv_b"][None, :, :]
    proj4 = proj.reshape(B, D, 16, L // 16)                          # rearrange 'b n (t1 t2)'
    # TODO(synk): transformer stand-in (must match the kernel's stand-in)
    feat = jnp.mean(proj4, axis=(2, 3))                              # (B, D)
    hs = p["query_embed"][None, :, :] + feat[:, None, :]             # (B, Q, D)
    cls = hs @ p["wc"].T + p["bc"]
    h1 = jax.nn.relu(hs @ p["w1"].T + p["b1"])
    h2 = jax.nn.relu(h1 @ p["w2"].T + p["b2"])
    box = jax.nn.sigmoid(h2 @ p["w3"].T + p["b3"])
    return {"pred_logits": cls, "pred_boxes": box}


def init_params(key):
    ks = jax.random.split(key, 12)

    def rnd(k, shape, scale=0.1):
        return (scale * jax.random.normal(k, shape)).astype(jnp.float32)

    return {
        # LayerNorm(channels_first) over backbone.num_channels
        "ln_gamma": rnd(ks[0], (C, 1), 0.05) + 1.0,
        "ln_beta": rnd(ks[1], (C, 1)),
        # nn.Conv1d(C, D, kernel_size=1): weight (D, C, 1) -> (D, C)
        "conv_w": rnd(ks[2], (D, C)),
        "conv_b": rnd(ks[3], (D, 1)),
        # nn.Embedding(num_queries, hidden_dim)
        "query_embed": rnd(ks[4], (Q, D), 1.0),
        # class_embed: nn.Linear(D, num_classes + 1)
        "wc": rnd(ks[5], (NC1, D)),
        "bc": rnd(ks[6], (NC1,)),
        # bbox_embed: MLP(D, D, 4, 3)
        "w1": rnd(ks[7], (D, D)),
        "b1": rnd(ks[8], (D,)),
        "w2": rnd(ks[9], (D, D)),
        "b2": rnd(ks[10], (D,)),
        "w3": rnd(ks[11], (4, D)),
        "b3": jnp.zeros((4,), jnp.float32),
    }


if __name__ == "__main__":
    key = jax.random.PRNGKey(0)
    k_src, k_param = jax.random.split(key)

    # TODO(synk): `backbone` is an external module (backbone.py); its feature map is
    # synthesized here directly in channels-last (B, L, C) layout so the kernel input is
    # lane-dense without a per-call transpose. mask/pos/vc are unused on this code path
    # (box_feature == 'x'; mask only feeds the external transformer).
    src_cl = jax.random.normal(k_src, (B, L, C), dtype=jnp.float32)
    params = init_params(k_param)
    slab = prepare_params(params)            # one-time fold + pack of all constants

    out = rftr_forward(src_cl, slab)
    jax.block_until_ready(out)

    src_cf = jnp.transpose(src_cl, (0, 2, 1))          # channels-first, reference only
    ref = rftr_reference(src_cf, params)
    np.testing.assert_allclose(np.asarray(out["pred_logits"]),
                               np.asarray(ref["pred_logits"]), rtol=1e-5, atol=1e-5)
    np.testing.assert_allclose(np.asarray(out["pred_boxes"]),
                               np.asarray(ref["pred_boxes"]), rtol=1e-5, atol=1e-5)
    assert out["pred_logits"].shape == (B, Q, NC1)
    assert out["pred_boxes"].shape == (B, Q, 4)
    print("KERNEL_OK")
</pallas_src>

<mosaic_0001>
module attributes {stable_mosaic.version = 11 : i64} {
  func.func @rftr_fused_kernel(%arg0: memref<64x32xf32, #tpu.memory_space<vmem>>, %arg1: memref<208x128xf32, #tpu.memory_space<vmem>>, %arg2: memref<16x128xf32, #tpu.memory_space<vmem>>) attributes {dimension_semantics = [], scalar_prefetch = 0 : i64, scratch_operands = 0 : i64, tpu.core_type = #tpu.core_type<tc>} {
    %c0 = arith.constant 0 : index
    %c0_0 = arith.constant 0 : index
    %0 = vector.load %arg0[%c0, %c0_0] : memref<64x32xf32, #tpu.memory_space<vmem>>, vector<64x32xf32>
    %c0_1 = arith.constant 0 : index
    %c0_2 = arith.constant 0 : index
    %1 = vector.load %arg1[%c0_1, %c0_2] : memref<208x128xf32, #tpu.memory_space<vmem>>, vector<1x32xf32>
    %c8 = arith.constant 8 : index
    %c0_3 = arith.constant 0 : index
    %2 = vector.load %arg1[%c8, %c0_3] : memref<208x128xf32, #tpu.memory_space<vmem>>, vector<1x32xf32>
    %cst = arith.constant dense<0.000000e+00> : vector<64xf32>
    %3 = vector.multi_reduction <add>, %0, %cst [1] : vector<64x32xf32> to vector<64xf32>
    %4 = vector.shape_cast %3 : vector<64xf32> to vector<64x1xf32>
    %cst_4 = arith.constant 3.200000e+01 : f32
    %5 = vector.broadcast %cst_4 : f32 to vector<64x1xf32>
    %6 = arith.divf %4, %5 : vector<64x1xf32>
    %7 = vector.broadcast %6 : vector<64x1xf32> to vector<64x32xf32>
    %8 = arith.subf %0, %7 : vector<64x32xf32>
    %9 = arith.mulf %8, %8 : vector<64x32xf32>
    %cst_5 = arith.constant dense<0.000000e+00> : vector<64xf32>
    %10 = vector.multi_reduction <add>, %9, %cst_5 [1] : vector<64x32xf32> to vector<64xf32>
    %11 = vector.shape_cast %10 : vector<64xf32> to vector<64x1xf32>
    %cst_6 = arith.constant 3.200000e+01 : f32
    %12 = vector.broadcast %cst_6 : f32 to vector<64x1xf32>
    %13 = arith.divf %11, %12 : vector<64x1xf32>
    %cst_7 = arith.constant 9.99999997E-7 : f32
    %14 = vector.broadcast %cst_7 : f32 to vector<64x1xf32>
    %15 = arith.addf %13, %14 : vector<64x1xf32>
    %16 = math.rsqrt %15 : vector<64x1xf32>
    %17 = vector.broadcast %16 : vector<64x1xf32> to vector<64x32xf32>
    %18 = arith.mulf %8, %17 : vector<64x32xf32>
    %19 = vector.broadcast %1 : vector<1x32xf32> to vector<64x32xf32>
    %20 = arith.mulf %19, %18 : vector<64x32xf32>
    %21 = vector.broadcast %2 : vector<1x32xf32> to vector<64x32xf32>
    %22 = arith.addf %20, %21 : vector<64x32xf32>
    %c16 = arith.constant 16 : index
    %c0_8 = arith.constant 0 : index
    %23 = vector.load %arg1[%c16, %c0_8] : memref<208x128xf32, #tpu.memory_space<vmem>>, vector<16x64xf32>
    %cst_9 = arith.constant dense<0.000000e+00> : vector<16x32xf32>
    %24 = tpu.matmul %23, %22, %cst_9 {dimension_numbers = #tpu.dot_dimension_numbers<[1], [0], [0], [1], [0, 0, 1, 1], [], []>} : vector<16x64xf32>, vector<64x32xf32>, vector<16x32xf32> -> vector<16x32xf32>
    %c32 = arith.constant 32 : index
    %c0_10 = arith.constant 0 : index
    %25 = vector.load %arg1[%c32, %c0_10] : memref<208x128xf32, #tpu.memory_space<vmem>>, vector<32x32xf32>
    %cst_11 = arith.constant dense<0.000000e+00> : vector<16x32xf32>
    %26 = tpu.matmul %24, %25, %cst_11 {dimension_numbers = #tpu.dot_dimension_numbers<[1], [0], [0], [1], [0, 0, 1, 1], [], []>} : vector<16x32xf32>, vector<32x32xf32>, vector<16x32xf32> -> vector<16x32xf32>
    %c64 = arith.constant 64 : index
    %c0_12 = arith.constant 0 : index
    %27 = vector.load %arg1[%c64, %c0_12] : memref<208x128xf32, #tpu.memory_space<vmem>>, vector<16x32xf32>
    %28 = arith.addf %26, %27 : vector<16x32xf32>
    %cst_13 = arith.constant 0.000000e+00 : f32
    %29 = vector.broadcast %cst_13 : f32 to vector<16x32xf32>
    %30 = arith.maximumf %28, %29 : vector<16x32xf32>
    %c80 = arith.constant 80 : index
    %c0_14 = arith.constant 0 : index
    %31 = vector.load %arg1[%c80, %c0_14] : memref<208x128xf32, #tpu.memory_space<vmem>>, vector<32x128xf32>
    %cst_15 = arith.constant dense<0.000000e+00> : vector<16x128xf32>
    %32 = tpu.matmul %24, %31, %cst_15 {dimension_numbers = #tpu.dot_dimension_numbers<[1], [0], [0], [1], [0, 0, 1, 1], [], []>} : vector<16x32xf32>, vector<32x128xf32>, vector<16x128xf32> -> vector<16x128xf32>
    %c112 = arith.constant 112 : index
    %c0_16 = arith.constant 0 : index
    %33 = vector.load %arg1[%c112, %c0_16] : memref<208x128xf32, #tpu.memory_space<vmem>>, vector<16x128xf32>
    %34 = arith.addf %32, %33 : vector<16x128xf32>
    %c128 = arith.constant 128 : index
    %c0_17 = arith.constant 0 : index
    %35 = vector.load %arg1[%c128, %c0_17] : memref<208x128xf32, #tpu.memory_space<vmem>>, vector<32x32xf32>
    %cst_18 = arith.constant dense<0.000000e+00> : vector<16x32xf32>
    %36 = tpu.matmul %30, %35, %cst_18 {dimension_numbers = #tpu.dot_dimension_numbers<[1], [0], [0], [1], [0, 0, 1, 1], [], []>} : vector<16x32xf32>, vector<32x32xf32>, vector<16x32xf32> -> vector<16x32xf32>
    %c160 = arith.constant 160 : index
    %c0_19 = arith.constant 0 : index
    %37 = vector.load %arg1[%c160, %c0_19] : memref<208x128xf32, #tpu.memory_space<vmem>>, vector<1x32xf32>
    %38 = vector.broadcast %37 : vector<1x32xf32> to vector<16x32xf32>
    %39 = arith.addf %36, %38 : vector<16x32xf32>
    %cst_20 = arith.constant 0.000000e+00 : f32
    %40 = vector.broadcast %cst_20 : f32 to vector<16x32xf32>
    %41 = arith.maximumf %39, %40 : vector<16x32xf32>
    %c168 = arith.constant 168 : index
    %c0_21 = arith.constant 0 : index
    %42 = vector.load %arg1[%c168, %c0_21] : memref<208x128xf32, #tpu.memory_space<vmem>>, vector<32x128xf32>
    %cst_22 = arith.constant dense<0.000000e+00> : vector<16x128xf32>
    %43 = tpu.matmul %41, %42, %cst_22 {dimension_numbers = #tpu.dot_dimension_numbers<[1], [0], [0], [1], [0, 0, 1, 1], [], []>} : vector<16x32xf32>, vector<32x128xf32>, vector<16x128xf32> -> vector<16x128xf32>
    %c200 = arith.constant 200 : index
    %c0_23 = arith.constant 0 : index
    %44 = vector.load %arg1[%c200, %c0_23] : memref<208x128xf32, #tpu.memory_space<vmem>>, vector<1x128xf32>
    %45 = vector.broadcast %44 : vector<1x128xf32> to vector<16x128xf32>
    %46 = arith.addf %43, %45 : vector<16x128xf32>
    %47 = tpu.iota {dimensions = array<i32: 1>} : vector<16x128xi32>
    %c4_i32 = arith.constant 4 : i32
    %48 = vector.broadcast %c4_i32 : i32 to vector<16x128xi32>
    %49 = arith.cmpi sge, %47, %48 : vector<16x128xi32>
    %c8_i32 = arith.constant 8 : i32
    %50 = vector.broadcast %c8_i32 : i32 to vector<16x128xi32>
    %51 = arith.cmpi slt, %47, %50 : vector<16x128xi32>
    %52 = arith.andi %49, %51 : vector<16x128xi1>
    %53 = arith.negf %46 : vector<16x128xf32>
    %54 = math.exp %53 : vector<16x128xf32>
    %cst_24 = arith.constant 1.000000e+00 : f32
    %55 = vector.broadcast %cst_24 : f32 to vector<16x128xf32>
    %56 = arith.addf %55, %54 : vector<16x128xf32>
    %57 = arith.divf %55, %56 : vector<16x128xf32>
    %58 = arith.select %52, %57, %34 : vector<16x128xi1>, vector<16x128xf32>
    %c0_25 = arith.constant 0 : index
    %c0_26 = arith.constant 0 : index
    %59 = vector.load %arg2[%c0_25, %c0_26] : memref<16x128xf32, #tpu.memory_space<vmem>>, vector<16x128xf32>
    tpu.vector_store %arg2[%c0_25, %c0_26], %58 {strides = array<i32>} : memref<16x128xf32, #tpu.memory_space<vmem>>, vector<16x128xf32>,
    return
  }
}

</mosaic_0001>

<llo_original>
// kernel: tpu_custom_call.1
$region0: #{tpu_custom_call.1}
  #allocation0 [shape = 'u32[]', space=smem, size = 0x4, offset = 0x4, fixed_abs, tag = 'smem constant byte address 0x4 - core index']
  #allocation1 [shape = 'u32[144,128]{1,0:T(1,128)}', space=vmem, size = 0x12000, scoped, tag = 'internal scratch']
  %s0 = inlined_call_operand.vmem [shape: f32[64,32], index: 0, kind: input, shape index: {}]
  %s1 = inlined_call_operand.hbm [shape: f32[208,128], index: 1, kind: input, shape index: {}]
  %s2 = inlined_call_operand.hbm [shape: f32[16,128], index: 2, kind: output, shape index: {}]
  %s3 = sld [smem:[#allocation0]]
  $region22: #{tpu_custom_call.1} parent=0
    _
  %s5 = ssub.s32 1, %s3
  %s6 = scalar_select 0, %s5, %s3
  $region1: #{tpu_custom_call.1} parent=0
    #allocation2 [shape = 'u8[106496]{0}', space=vmem, size = 0x1a000, scoped, tag = 'input window, operand 1, single buffered']
    #allocation3 [shape = 's32[1]{0}', space=sflag, size = 0x4, scoped, tag = 'scoped memory for tpu_custom_call.1']
    #allocation4 [shape = 's32[1]{0}', space=sflag, size = 0x4, scoped, tag = 'scoped memory for tpu_custom_call.1']
    #allocation5 [shape = 'u8[8192]{0}', space=vmem, size = 0x2000, scoped, tag = 'output window, operand 0, single buffered']
    %7 = vsyncpa [#allocation3], 0
    %8 = vsyncpa [#allocation4], 0
    // Predicated region
    $region2: #{tpu_custom_call.1} parent=1 // pred_check
      _
    $region3: #{tpu_custom_call.1} parent=1 // pred_check_branch
      %10 = sbr.rel (0) target = $region5
    $region4: #{tpu_custom_call.1} parent=1 // pred_region
      _
    $region5: #{tpu_custom_call.1} parent=1 // pred_fallthru
      _
    // Predicated region
    $region6: #{tpu_custom_call.1} parent=1 // pred_check
      _
    $region7: #{tpu_custom_call.1} parent=1 // pred_check_branch
      %12 = sbr.rel (0) target = $region9
    $region8: #{tpu_custom_call.1} parent=1 // pred_region
      %s14 = ssub.s32 3328, 3328
      %15 = vsyncadd [#allocation3], %s14
      %s16 = sshll.u32 [#allocation2], 4
      %s17 = int_to_ptr.vmem [resolvable:$true] %s16
      %22 = dma.hbm_to_vmem [thread:$0]  %s1, 3328, %s17, [#allocation3], 128, 128, 8
    $region9: #{tpu_custom_call.1} parent=1 // pred_fallthru
      _
    // Predicated region
    $region10: #{tpu_custom_call.1} parent=1 // pred_check
      _
    $region11: #{tpu_custom_call.1} parent=1 // pred_check_branch
      %24 = sbr.rel (0) target = $region13
    $region12: #{tpu_custom_call.1} parent=1 // pred_region
      %25 = dma.done [#allocation3], 3328
    $region13: #{tpu_custom_call.1} parent=1 // pred_fallthru
      _
    %v26 = vld [vmem:[%s0] sm:$0xff]
    %v27 = vld [vmem:[%s0 + $0x8] sm:$0xff]
    %v28 = vld [vmem:[%s0 + $0x10] sm:$0xff]
    %v29 = vld [vmem:[%s0 + $0x18] sm:$0xff]
    %v30 = vld [vmem:[%s0 + $0x20] sm:$0xff]
    %v31 = vld [vmem:[%s0 + $0x28] sm:$0xff]
    %v32 = vld [vmem:[%s0 + $0x30] sm:$0xff]
    %v33 = vld [vmem:[%s0 + $0x38] sm:$0xff]
    %v34 = vld [vmem:[#allocation2] sm:$0x1]
    %v35 = vld [vmem:[#allocation2 + $0x8] sm:$0x1]
    %vm36 = vcmask 261120
    %v37 = vsel %vm36, %v26, 0.0
    %38 = vadd.xlane.f32.xlu0 %v37
    %v39 = vpop.xlane.xlu0 %38
    %v40 = vsel %vm36, %v27, 0.0
    %41 = vadd.xlane.f32.xlu0 %v40
    %v42 = vpop.xlane.xlu0 %41
    %v43 = vsel %vm36, %v28, 0.0
    %44 = vadd.xlane.f32.xlu0 %v43
    %v45 = vpop.xlane.xlu0 %44
    %v46 = vsel %vm36, %v29, 0.0
    %47 = vadd.xlane.f32.xlu0 %v46
    %v48 = vpop.xlane.xlu0 %47
    %v49 = vsel %vm36, %v30, 0.0
    %50 = vadd.xlane.f32.xlu0 %v49
    %v51 = vpop.xlane.xlu0 %50
    %v52 = vsel %vm36, %v31, 0.0
    %53 = vadd.xlane.f32.xlu0 %v52
    %v54 = vpop.xlane.xlu0 %53
    %v55 = vsel %vm36, %v32, 0.0
    %56 = vadd.xlane.f32.xlu0 %v55
    %v57 = vpop.xlane.xlu0 %56
    %v58 = vsel %vm36, %v33, 0.0
    %59 = vadd.xlane.f32.xlu0 %v58
    %v60 = vpop.xlane.xlu0 %59
    %v61 = vrcp.pop 32.0
    %v62 = vmul.f32 %v39, %v61
    %v63 = vmul.f32 %v42, %v61
    %v64 = vmul.f32 %v45, %v61
    %v65 = vmul.f32 %v48, %v61
    %v66 = vmul.f32 %v51, %v61
    %v67 = vmul.f32 %v54, %v61
    %v68 = vmul.f32 %v57, %v61
    %v69 = vmul.f32 %v60, %v61
    %v70 = vsub.f32 %v26, %v62
    %v71 = vsub.f32 %v27, %v63
    %v72 = vsub.f32 %v28, %v64
    %v73 = vsub.f32 %v29, %v65
    %v74 = vsub.f32 %v30, %v66
    %v75 = vsub.f32 %v31, %v67
    %v76 = vsub.f32 %v32, %v68
    %v77 = vsub.f32 %v33, %v69
    %v78 = vmul.f32 %v70, %v70
    %v79 = vmul.f32 %v71, %v71
    %v80 = vmul.f32 %v72, %v72
    %v81 = vmul.f32 %v73, %v73
    %v82 = vmul.f32 %v74, %v74
    %v83 = vmul.f32 %v75, %v75
    %v84 = vmul.f32 %v76, %v76
    %v85 = vmul.f32 %v77, %v77
    %v86 = vsel %vm36, %v78, 0.0
    %87 = vadd.xlane.f32.xlu0 %v86
    %v88 = vpop.xlane.xlu0 %87
    %v89 = vsel %vm36, %v79, 0.0
    %90 = vadd.xlane.f32.xlu0 %v89
    %v91 = vpop.xlane.xlu0 %90
    %v92 = vsel %vm36, %v80, 0.0
    %93 = vadd.xlane.f32.xlu0 %v92
    %v94 = vpop.xlane.xlu0 %93
    %v95 = vsel %vm36, %v81, 0.0
    %96 = vadd.xlane.f32.xlu0 %v95
    %v97 = vpop.xlane.xlu0 %96
    %v98 = vsel %vm36, %v82, 0.0
    %99 = vadd.xlane.f32.xlu0 %v98
    %v100 = vpop.xlane.xlu0 %99
    %v101 = vsel %vm36, %v83, 0.0
    %102 = vadd.xlane.f32.xlu0 %v101
    %v103 = vpop.xlane.xlu0 %102
    %v104 = vsel %vm36, %v84, 0.0
    %105 = vadd.xlane.f32.xlu0 %v104
    %v106 = vpop.xlane.xlu0 %105
    %v107 = vsel %vm36, %v85, 0.0
    %108 = vadd.xlane.f32.xlu0 %v107
    %v109 = vpop.xlane.xlu0 %108
    %v110 = vmul.f32 %v88, %v61
    %v111 = vmul.f32 %v91, %v61
    %v112 = vmul.f32 %v94, %v61
    %v113 = vmul.f32 %v97, %v61
    %v114 = vmul.f32 %v100, %v61
    %v115 = vmul.f32 %v103, %v61
    %v116 = vmul.f32 %v106, %v61
    %v117 = vmul.f32 %v109, %v61
    %v118 = vadd.f32 %v110, 1e-06
    %v119 = vadd.f32 %v111, 1e-06
    %v120 = vadd.f32 %v112, 1e-06
    %v121 = vadd.f32 %v113, 1e-06
    %v122 = vadd.f32 %v114, 1e-06
    %v123 = vadd.f32 %v115, 1e-06
    %v124 = vadd.f32 %v116, 1e-06
    %v125 = vadd.f32 %v117, 1e-06
    %v126 = vrsqrt.pop %v118
    %v127 = vrsqrt.pop %v119
    %v128 = vrsqrt.pop %v120
    %v129 = vrsqrt.pop %v121
    %v130 = vrsqrt.pop %v122
    %v131 = vrsqrt.pop %v123
    %v132 = vrsqrt.pop %v124
    %v133 = vrsqrt.pop %v125
    %v134 = vmul.f32 %v70, %v126
    %v135 = vmul.f32 %v71, %v127
    %v136 = vmul.f32 %v72, %v128
    %v137 = vmul.f32 %v73, %v129
    %v138 = vmul.f32 %v74, %v130
    %v139 = vmul.f32 %v75, %v131
    %v140 = vmul.f32 %v76, %v132
    %v141 = vmul.f32 %v77, %v133
    %v142 = vlaneseq
    %v143 = vshrl.u32 %v142, 7
    %v144 = vsub.s32 0, %v143
    %v145 = vrot.slane %v34, %v144
    %v146 = vmul.f32 %v145, %v134
    %v147 = vmul.f32 %v145, %v135
    %v148 = vmul.f32 %v145, %v136
    %v149 = vmul.f32 %v145, %v137
    %v150 = vmul.f32 %v145, %v138
    %v151 = vmul.f32 %v145, %v139
    %v152 = vmul.f32 %v145, %v140
    %v153 = vmul.f32 %v145, %v141
    %v154 = vlaneseq
    %v155 = vshrl.u32 %v154, 7
    %v156 = vsub.s32 0, %v155
    %v157 = vrot.slane %v35, %v156
    %v158 = vadd.f32 %v146, %v157
    %v159 = vadd.f32 %v147, %v157
    %v160 = vadd.f32 %v148, %v157
    %v161 = vadd.f32 %v149, %v157
    %v162 = vadd.f32 %v150, %v157
    %v163 = vadd.f32 %v151, %v157
    %v164 = vadd.f32 %v152, %v157
    %v165 = vadd.f32 %v153, %v157
    %v166 = vld [vmem:[#allocation2 + $0x10] sm:$0xff]
    %v167 = vld [vmem:[#allocation2 + $0x18] sm:$0xff]
    %vm168 = vcmask 523264
    %v170 = vsel %vm168, %v166, 0
    %v173 = vsel %vm168, %v167, 0
    %175 = vmatprep.subr.mxu0 0.0
    %176 = vmatpush1.msra.mxu0 0.0
    %177 = vmatprep.subr.mxu0 0.0
    %178 = vmatpush1.msra.mxu0 0.0
    %179 = vmatprep.subr.mxu0 0.0
    %180 = vmatpush1.msra.mxu0 0.0
    %181 = vmatprep.subr.mxu0 0.0
    %182 = vmatpush1.msra.mxu0 0.0
    %183 = vmatprep.subr.mxu0 0.0
    %184 = vmatpush1.msra.mxu0 0.0
    %185 = vmatprep.subr.mxu0 0.0
    %186 = vmatpush1.msra.mxu0 0.0
    %187 = vmatprep.subr.mxu0 0.0
    %188 = vmatpush1.msra.mxu0 0.0
    %189 = vmatprep.subr.mxu0 0.0
    %190 = vmatpush1.msra.mxu0 0.0
    %191 = vmatprep.subr.mxu0 0.0
    %192 = vmatpush1.msra.mxu0 %v165
    %193 = vmatprep.subr.mxu0 0.0
    %194 = vmatpush1.msra.mxu0 %v164
    %195 = vmatprep.subr.mxu0 0.0
    %196 = vmatpush1.msra.mxu0 %v163
    %197 = vmatprep.subr.mxu0 0.0
    %198 = vmatpush1.msra.mxu0 %v162
    %199 = vmatprep.subr.mxu0 0.0
    %200 = vmatpush1.msra.mxu0 %v161
    %201 = vmatprep.subr.mxu0 0.0
    %202 = vmatpush1.msra.mxu0 %v160
    %203 = vmatprep.subr.mxu0 0.0
    %204 = vmatpush1.msra.mxu0 %v159
    %205 = vmatprep.subr.mxu0 0.0
    %206 = vmatpush1.msra.mxu0 %v158
    %207 = vmatprep.subr.mxu0 0.0
    %208 = vmatpush2.msra.mxu0 0.0
    %209 = vmatprep.subr.mxu0 0.0
    %210 = vmatpush2.msra.mxu0 0.0
    %211 = vmatprep.subr.mxu0 0.0
    %212 = vmatpush2.msra.mxu0 0.0
    %213 = vmatprep.subr.mxu0 0.0
    %214 = vmatpush2.msra.mxu0 0.0
    %215 = vmatprep.subr.mxu0 0.0
    %216 = vmatpush2.msra.mxu0 0.0
    %217 = vmatprep.subr.mxu0 0.0
    %218 = vmatpush2.msra.mxu0 0.0
    %219 = vmatprep.subr.mxu0 0.0
    %220 = vmatpush2.msra.mxu0 0.0
    %221 = vmatprep.subr.mxu0 0.0
    %222 = vmatpush2.msra.mxu0 0.0
    %223 = vmatprep.subr.mxu0 0.0
    %224 = vmatpush2.msra.mxu0 0.0
    %225 = vmatprep.subr.mxu0 0.0
    %226 = vmatpush2.msra.mxu0 0.0
    %227 = vmatprep.subr.mxu0 0.0
    %228 = vmatpush2.msra.mxu0 0.0
    %229 = vmatprep.subr.mxu0 0.0
    %230 = vmatpush2.msra.mxu0 0.0
    %231 = vmatprep.subr.mxu0 0.0
    %232 = vmatpush2.msra.mxu0 0.0
    %233 = vmatprep.subr.mxu0 0.0
    %234 = vmatpush2.msra.mxu0 0.0
    %235 = vmatprep.subr.mxu0 0.0
    %236 = vmatpush2.msra.mxu0 0.0
    %237 = vmatprep.subr.mxu0 0.0
    %238 = vmatpush2.msra.mxu0 0.0
    %239 = vmatprep.mubr.f32.mxu0 0.0
    %240 = vmatmul.mubr.f32.gmra.mxu0 %v170
    %v241 = vpop.f32.mrf.mxu0
    %v242 = vadd.f32 0.0, %v241
    %v243 = vpop.f32.mrf.mxu0
    %244 = vmatprep.mubr.f32.mxu0 0.0
    %245 = vmatmul.mubr.f32.gmra.mxu0 %v173
    %v246 = vpop.f32.mrf.mxu0
    %v247 = vadd.f32 0.0, %v246
    %v248 = vpop.f32.mrf.mxu0
    %249 = vdwg.mxu0
    %v250 = vld [vmem:[#allocation2 + $0x20] sm:$0xff]
    %v251 = vld [vmem:[#allocation2 + $0x28] sm:$0xff]
    %v252 = vld [vmem:[#allocation2 + $0x30] sm:$0xff]
    %v253 = vld [vmem:[#allocation2 + $0x38] sm:$0xff]
    %v254 = vld [vmem:[#allocation2 + $0x40] sm:$0xff]
    %v255 = vld [vmem:[#allocation2 + $0x48] sm:$0xff]
    %v257 = vsel %vm36, %v242, 0
    %v260 = vsel %vm36, %v247, 0
    %262 = vmatprep.subr.mxu0 0.0
    %263 = vmatpush1.msra.mxu0 0.0
    %264 = vmatprep.subr.mxu0 0.0
    %265 = vmatpush1.msra.mxu0 0.0
    %266 = vmatprep.subr.mxu0 0.0
    %267 = vmatpush1.msra.mxu0 0.0
    %268 = vmatprep.subr.mxu0 0.0
    %269 = vmatpush1.msra.mxu0 0.0
    %270 = vmatprep.subr.mxu0 0.0
    %271 = vmatpush1.msra.mxu0 0.0
    %272 = vmatprep.subr.mxu0 0.0
    %273 = vmatpush1.msra.mxu0 0.0
    %274 = vmatprep.subr.mxu0 0.0
    %275 = vmatpush1.msra.mxu0 0.0
    %276 = vmatprep.subr.mxu0 0.0
    %277 = vmatpush1.msra.mxu0 0.0
    %278 = vmatprep.subr.mxu0 0.0
    %279 = vmatpush1.msra.mxu0 0.0
    %280 = vmatprep.subr.mxu0 0.0
    %281 = vmatpush1.msra.mxu0 0.0
    %282 = vmatprep.subr.mxu0 0.0
    %283 = vmatpush1.msra.mxu0 0.0
    %284 = vmatprep.subr.mxu0 0.0
    %285 = vmatpush1.msra.mxu0 0.0
    %286 = vmatprep.subr.mxu0 0.0
    %287 = vmatpush1.msra.mxu0 %v253
    %288 = vmatprep.subr.mxu0 0.0
    %289 = vmatpush1.msra.mxu0 %v252
    %290 = vmatprep.subr.mxu0 0.0
    %291 = vmatpush1.msra.mxu0 %v251
    %292 = vmatprep.subr.mxu0 0.0
    %293 = vmatpush1.msra.mxu0 %v250
    %294 = vmatprep.subr.mxu0 0.0
    %295 = vmatpush2.msra.mxu0 0.0
    %296 = vmatprep.subr.mxu0 0.0
    %297 = vmatpush2.msra.mxu0 0.0
    %298 = vmatprep.subr.mxu0 0.0
    %299 = vmatpush2.msra.mxu0 0.0
    %300 = vmatprep.subr.mxu0 0.0
    %301 = vmatpush2.msra.mxu0 0.0
    %302 = vmatprep.subr.mxu0 0.0
    %303 = vmatpush2.msra.mxu0 0.0
    %304 = vmatprep.subr.mxu0 0.0
    %305 = vmatpush2.msra.mxu0 0.0
    %306 = vmatprep.subr.mxu0 0.0
    %307 = vmatpush2.msra.mxu0 0.0
    %308 = vmatprep.subr.mxu0 0.0
    %309 = vmatpush2.msra.mxu0 0.0
    %310 = vmatprep.subr.mxu0 0.0
    %311 = vmatpush2.msra.mxu0 0.0
    %312 = vmatprep.subr.mxu0 0.0
    %313 = vmatpush2.msra.mxu0 0.0
    %314 = vmatprep.subr.mxu0 0.0
    %315 = vmatpush2.msra.mxu0 0.0
    %316 = vmatprep.subr.mxu0 0.0
    %317 = vmatpush2.msra.mxu0 0.0
    %318 = vmatprep.subr.mxu0 0.0
    %319 = vmatpush2.msra.mxu0 0.0
    %320 = vmatprep.subr.mxu0 0.0
    %321 = vmatpush2.msra.mxu0 0.0
    %322 = vmatprep.subr.mxu0 0.0
    %323 = vmatpush2.msra.mxu0 0.0
    %324 = vmatprep.subr.mxu0 0.0
    %325 = vmatpush2.msra.mxu0 0.0
    %326 = vmatprep.mubr.f32.mxu0 0.0
    %327 = vmatmul.mubr.f32.gmra.mxu0 %v257
    %v328 = vpop.f32.mrf.mxu0
    %v329 = vadd.f32 %v254, %v328
    %v330 = vpop.f32.mrf.mxu0
    %331 = vmatprep.mubr.f32.mxu0 0.0
    %332 = vmatmul.mubr.f32.gmra.mxu0 %v260
    %v333 = vpop.f32.mrf.mxu0
    %v334 = vadd.f32 %v255, %v333
    %v335 = vpop.f32.mrf.mxu0
    %336 = vdwg.mxu0
    %v337 = vmax.f32 %v329, 0.0
    %v338 = vmax.f32 %v334, 0.0
    %v339 = vld [vmem:[#allocation2 + $0x50] sm:$0xff]
    %v340 = vld [vmem:[#allocation2 + $0x58] sm:$0xff]
    %v341 = vld [vmem:[#allocation2 + $0x60] sm:$0xff]
    %v342 = vld [vmem:[#allocation2 + $0x68] sm:$0xff]
    %v343 = vld [vmem:[#allocation2 + $0x70] sm:$0xff]
    %v344 = vld [vmem:[#allocation2 + $0x78] sm:$0xff]
    %345 = vmatprep.subr.mxu0 0.0
    %346 = vmatpush1.msra.mxu0 0.0
    %347 = vmatprep.subr.mxu0 0.0
    %348 = vmatpush1.msra.mxu0 0.0
    %349 = vmatprep.subr.mxu0 0.0
    %350 = vmatpush1.msra.mxu0 0.0
    %351 = vmatprep.subr.mxu0 0.0
    %352 = vmatpush1.msra.mxu0 0.0
    %353 = vmatprep.subr.mxu0 0.0
    %354 = vmatpush1.msra.mxu0 0.0
    %355 = vmatprep.subr.mxu0 0.0
    %356 = vmatpush1.msra.mxu0 0.0
    %357 = vmatprep.subr.mxu0 0.0
    %358 = vmatpush1.msra.mxu0 0.0
    %359 = vmatprep.subr.mxu0 0.0
    %360 = vmatpush1.msra.mxu0 0.0
    %361 = vmatprep.subr.mxu0 0.0
    %362 = vmatpush1.msra.mxu0 0.0
    %363 = vmatprep.subr.mxu0 0.0
    %364 = vmatpush1.msra.mxu0 0.0
    %365 = vmatprep.subr.mxu0 0.0
    %366 = vmatpush1.msra.mxu0 0.0
    %367 = vmatprep.subr.mxu0 0.0
    %368 = vmatpush1.msra.mxu0 0.0
    %369 = vmatprep.subr.mxu0 0.0
    %370 = vmatpush1.msra.mxu0 %v342
    %371 = vmatprep.subr.mxu0 0.0
    %372 = vmatpush1.msra.mxu0 %v341
    %373 = vmatprep.subr.mxu0 0.0
    %374 = vmatpush1.msra.mxu0 %v340
    %375 = vmatprep.subr.mxu0 0.0
    %376 = vmatpush1.msra.mxu0 %v339
    %377 = vmatprep.subr.mxu0 0.0
    %378 = vmatpush2.msra.mxu0 0.0
    %379 = vmatprep.subr.mxu0 0.0
    %380 = vmatpush2.msra.mxu0 0.0
    %381 = vmatprep.subr.mxu0 0.0
    %382 = vmatpush2.msra.mxu0 0.0
    %383 = vmatprep.subr.mxu0 0.0
    %384 = vmatpush2.msra.mxu0 0.0
    %385 = vmatprep.subr.mxu0 0.0
    %386 = vmatpush2.msra.mxu0 0.0
    %387 = vmatprep.subr.mxu0 0.0
    %388 = vmatpush2.msra.mxu0 0.0
    %389 = vmatprep.subr.mxu0 0.0
    %390 = vmatpush2.msra.mxu0 0.0
    %391 = vmatprep.subr.mxu0 0.0
    %392 = vmatpush2.msra.mxu0 0.0
    %393 = vmatprep.subr.mxu0 0.0
    %394 = vmatpush2.msra.mxu0 0.0
    %395 = vmatprep.subr.mxu0 0.0
    %396 = vmatpush2.msra.mxu0 0.0
    %397 = vmatprep.subr.mxu0 0.0
    %398 = vmatpush2.msra.mxu0 0.0
    %399 = vmatprep.subr.mxu0 0.0
    %400 = vmatpush2.msra.mxu0 0.0
    %401 = vmatprep.subr.mxu0 0.0
    %402 = vmatpush2.msra.mxu0 0.0
    %403 = vmatprep.subr.mxu0 0.0
    %404 = vmatpush2.msra.mxu0 0.0
    %405 = vmatprep.subr.mxu0 0.0
    %406 = vmatpush2.msra.mxu0 0.0
    %407 = vmatprep.subr.mxu0 0.0
    %408 = vmatpush2.msra.mxu0 0.0
    %409 = vmatprep.mubr.f32.mxu0 0.0
    %410 = vmatmul.mubr.f32.gmra.mxu0 %v257
    %v411 = vpop.f32.mrf.mxu0
    %v412 = vadd.f32 %v343, %v411
    %v413 = vpop.f32.mrf.mxu0
    %414 = vmatprep.mubr.f32.mxu0 0.0
    %415 = vmatmul.mubr.f32.gmra.mxu0 %v260
    %v416 = vpop.f32.mrf.mxu0
    %v417 = vadd.f32 %v344, %v416
    %v418 = vpop.f32.mrf.mxu0
    %419 = vdwg.mxu0
    %v420 = vld [vmem:[#allocation2 + $0x80] sm:$0xff]
    %v421 = vld [vmem:[#allocation2 + $0x88] sm:$0xff]
    %v422 = vld [vmem:[#allocation2 + $0x90] sm:$0xff]
    %v423 = vld [vmem:[#allocation2 + $0x98] sm:$0xff]
    %v424 = vld [vmem:[#allocation2 + $0xa0] sm:$0x1]
    %v425 = vlaneseq
    %v426 = vshrl.u32 %v425, 7
    %v427 = vsub.s32 0, %v426
    %v428 = vrot.slane %v424, %v427
    %v430 = vsel %vm36, %v337, 0
    %v433 = vsel %vm36, %v338, 0
    %435 = vmatprep.subr.mxu0 0.0
    %436 = vmatpush1.msra.mxu0 0.0
    %437 = vmatprep.subr.mxu0 0.0
    %438 = vmatpush1.msra.mxu0 0.0
    %439 = vmatprep.subr.mxu0 0.0
    %440 = vmatpush1.msra.mxu0 0.0
    %441 = vmatprep.subr.mxu0 0.0
    %442 = vmatpush1.msra.mxu0 0.0
    %443 = vmatprep.subr.mxu0 0.0
    %444 = vmatpush1.msra.mxu0 0.0
    %445 = vmatprep.subr.mxu0 0.0
    %446 = vmatpush1.msra.mxu0 0.0
    %447 = vmatprep.subr.mxu0 0.0
    %448 = vmatpush1.msra.mxu0 0.0
    %449 = vmatprep.subr.mxu0 0.0
    %450 = vmatpush1.msra.mxu0 0.0
    %451 = vmatprep.subr.mxu0 0.0
    %452 = vmatpush1.msra.mxu0 0.0
    %453 = vmatprep.subr.mxu0 0.0
    %454 = vmatpush1.msra.mxu0 0.0
    %455 = vmatprep.subr.mxu0 0.0
    %456 = vmatpush1.msra.mxu0 0.0
    %457 = vmatprep.subr.mxu0 0.0
    %458 = vmatpush1.msra.mxu0 0.0
    %459 = vmatprep.subr.mxu0 0.0
    %460 = vmatpush1.msra.mxu0 %v423
    %461 = vmatprep.subr.mxu0 0.0
    %462 = vmatpush1.msra.mxu0 %v422
    %463 = vmatprep.subr.mxu0 0.0
    %464 = vmatpush1.msra.mxu0 %v421
    %465 = vmatprep.subr.mxu0 0.0
    %466 = vmatpush1.msra.mxu0 %v420
    %467 = vmatprep.subr.mxu0 0.0
    %468 = vmatpush2.msra.mxu0 0.0
    %469 = vmatprep.subr.mxu0 0.0
    %470 = vmatpush2.msra.mxu0 0.0
    %471 = vmatprep.subr.mxu0 0.0
    %472 = vmatpush2.msra.mxu0 0.0
    %473 = vmatprep.subr.mxu0 0.0
    %474 = vmatpush2.msra.mxu0 0.0
    %475 = vmatprep.subr.mxu0 0.0
    %476 = vmatpush2.msra.mxu0 0.0
    %477 = vmatprep.subr.mxu0 0.0
    %478 = vmatpush2.msra.mxu0 0.0
    %479 = vmatprep.subr.mxu0 0.0
    %480 = vmatpush2.msra.mxu0 0.0
    %481 = vmatprep.subr.mxu0 0.0
    %482 = vmatpush2.msra.mxu0 0.0
    %483 = vmatprep.subr.mxu0 0.0
    %484 = vmatpush2.msra.mxu0 0.0
    %485 = vmatprep.subr.mxu0 0.0
    %486 = vmatpush2.msra.mxu0 0.0
    %487 = vmatprep.subr.mxu0 0.0
    %488 = vmatpush2.msra.mxu0 0.0
    %489 = vmatprep.subr.mxu0 0.0
    %490 = vmatpush2.msra.mxu0 0.0
    %491 = vmatprep.subr.mxu0 0.0
    %492 = vmatpush2.msra.mxu0 0.0
    %493 = vmatprep.subr.mxu0 0.0
    %494 = vmatpush2.msra.mxu0 0.0
    %495 = vmatprep.subr.mxu0 0.0
    %496 = vmatpush2.msra.mxu0 0.0
    %497 = vmatprep.subr.mxu0 0.0
    %498 = vmatpush2.msra.mxu0 0.0
    %499 = vmatprep.mubr.f32.mxu0 0.0
    %500 = vmatmul.mubr.f32.gmra.mxu0 %v430
    %v501 = vpop.f32.mrf.mxu0
    %v502 = vadd.f32 %v428, %v501
    %v503 = vpop.f32.mrf.mxu0
    %504 = vmatprep.mubr.f32.mxu0 0.0
    %505 = vmatmul.mubr.f32.gmra.mxu0 %v433
    %v506 = vpop.f32.mrf.mxu0
    %v507 = vadd.f32 %v428, %v506
    %v508 = vpop.f32.mrf.mxu0
    %509 = vdwg.mxu0
    %v510 = vmax.f32 %v502, 0.0
    %v511 = vmax.f32 %v507, 0.0
    %v512 = vld [vmem:[#allocation2 + $0xa8] sm:$0xff]
    %v513 = vld [vmem:[#allocation2 + $0xb0] sm:$0xff]
    %v514 = vld [vmem:[#allocation2 + $0xb8] sm:$0xff]
    %v515 = vld [vmem:[#allocation2 + $0xc0] sm:$0xff]
    %v516 = vld [vmem:[#allocation2 + $0xc8] sm:$0x1]
    %v517 = vlaneseq
    %v518 = vshrl.u32 %v517, 7
    %v519 = vsub.s32 0, %v518
    %v520 = vrot.slane %v516, %v519
    %v522 = vsel %vm36, %v510, 0
    %v525 = vsel %vm36, %v511, 0
    %527 = vmatprep.subr.mxu0 0.0
    %528 = vmatpush1.msra.mxu0 0.0
    %529 = vmatprep.subr.mxu0 0.0
    %530 = vmatpush1.msra.mxu0 0.0
    %531 = vmatprep.subr.mxu0 0.0
    %532 = vmatpush1.msra.mxu0 0.0
    %533 = vmatprep.subr.mxu0 0.0
    %534 = vmatpush1.msra.mxu0 0.0
    %535 = vmatprep.subr.mxu0 0.0
    %536 = vmatpush1.msra.mxu0 0.0
    %537 = vmatprep.subr.mxu0 0.0
    %538 = vmatpush1.msra.mxu0 0.0
    %539 = vmatprep.subr.mxu0 0.0
    %540 = vmatpush1.msra.mxu0 0.0
    %541 = vmatprep.subr.mxu0 0.0
    %542 = vmatpush1.msra.mxu0 0.0
    %543 = vmatprep.subr.mxu0 0.0
    %544 = vmatpush1.msra.mxu0 0.0
    %545 = vmatprep.subr.mxu0 0.0
    %546 = vmatpush1.msra.mxu0 0.0
    %547 = vmatprep.subr.mxu0 0.0
    %548 = vmatpush1.msra.mxu0 0.0
    %549 = vmatprep.subr.mxu0 0.0
    %550 = vmatpush1.msra.mxu0 0.0
    %551 = vmatprep.subr.mxu0 0.0
    %552 = vmatpush1.msra.mxu0 %v515
    %553 = vmatprep.subr.mxu0 0.0
    %554 = vmatpush1.msra.mxu0 %v514
    %555 = vmatprep.subr.mxu0 0.0
    %556 = vmatpush1.msra.mxu0 %v513
    %557 = vmatprep.subr.mxu0 0.0
    %558 = vmatpush1.msra.mxu0 %v512
    %559 = vmatprep.subr.mxu0 0.0
    %560 = vmatpush2.msra.mxu0 0.0
    %561 = vmatprep.subr.mxu0 0.0
    %562 = vmatpush2.msra.mxu0 0.0
    %563 = vmatprep.subr.mxu0 0.0
    %564 = vmatpush2.msra.mxu0 0.0
    %565 = vmatprep.subr.mxu0 0.0
    %566 = vmatpush2.msra.mxu0 0.0
    %567 = vmatprep.subr.mxu0 0.0
    %568 = vmatpush2.msra.mxu0 0.0
    %569 = vmatprep.subr.mxu0 0.0
    %570 = vmatpush2.msra.mxu0 0.0
    %571 = vmatprep.subr.mxu0 0.0
    %572 = vmatpush2.msra.mxu0 0.0
    %573 = vmatprep.subr.mxu0 0.0
    %574 = vmatpush2.msra.mxu0 0.0
    %575 = vmatprep.subr.mxu0 0.0
    %576 = vmatpush2.msra.mxu0 0.0
    %577 = vmatprep.subr.mxu0 0.0
    %578 = vmatpush2.msra.mxu0 0.0
    %579 = vmatprep.subr.mxu0 0.0
    %580 = vmatpush2.msra.mxu0 0.0
    %581 = vmatprep.subr.mxu0 0.0
    %582 = vmatpush2.msra.mxu0 0.0
    %583 = vmatprep.subr.mxu0 0.0
    %584 = vmatpush2.msra.mxu0 0.0
    %585 = vmatprep.subr.mxu0 0.0
    %586 = vmatpush2.msra.mxu0 0.0
    %587 = vmatprep.subr.mxu0 0.0
    %588 = vmatpush2.msra.mxu0 0.0
    %589 = vmatprep.subr.mxu0 0.0
    %590 = vmatpush2.msra.mxu0 0.0
    %591 = vmatprep.mubr.f32.mxu0 0.0
    %592 = vmatmul.mubr.f32.gmra.mxu0 %v522
    %v593 = vpop.f32.mrf.mxu0
    %v594 = vadd.f32 %v520, %v593
    %v595 = vpop.f32.mrf.mxu0
    %596 = vmatprep.mubr.f32.mxu0 0.0
    %597 = vmatmul.mubr.f32.gmra.mxu0 %v525
    %v598 = vpop.f32.mrf.mxu0
    %v599 = vadd.f32 %v520, %v598
    %v600 = vpop.f32.mrf.mxu0
    %601 = vdwg.mxu0
    %v602 = vlaneseq
    %v603 = vand.u32 %v602, 127
    %vm604 = vcmp.ge.s32.totalorder %v603, 4
    %vm605 = vcmp.lt.s32.totalorder %v603, 8
    %vm606 = vmand %vm604, %vm605
    %v607 = vxor.u32 %v594, 2147483648
    %v608 = vxor.u32 %v599, 2147483648
    %v609 = vmul.f32 %v607, 1.442695
    %v610 = vpow.pop %v609
    %v611 = vmul.f32 %v608, 1.442695
    %v612 = vpow.pop %v611
    %v613 = vadd.f32 %v610, 1.0
    %v614 = vadd.f32 %v612, 1.0
    %v615 = vrcp.pop %v613
    %v616 = vmul.f32 1.0, %v615
    %v617 = vrcp.pop %v614
    %v618 = vmul.f32 1.0, %v617
    %v619 = vsel %vm606, %v616, %v412
    %v620 = vsel %vm606, %v618, %v417
    %621 = vst [vmem:[#allocation5] sm:$0xff] %v619
    %622 = vst [vmem:[#allocation5 + $0x8] sm:$0xff] %v620
    // Predicated region
    $region14: #{tpu_custom_call.1} parent=1 // pred_check
      _
    $region15: #{tpu_custom_call.1} parent=1 // pred_check_branch
      %624 = sbr.rel (0) target = $region17
    $region16: #{tpu_custom_call.1} parent=1 // pred_region
      %s626 = ssub.s32 256, 256
      %627 = vsyncadd [#allocation4], %s626
      %s628 = sshll.u32 [#allocation5], 4
      %s629 = int_to_ptr.vmem [resolvable:$true] %s628
      %634 = dma.vmem_to_hbm [thread:$0]  %s629, 256, %s2, [#allocation4], 128, 128, 8
    $region17: #{tpu_custom_call.1} parent=1 // pred_fallthru
      _
    // Predicated region
    $region18: #{tpu_custom_call.1} parent=1 // pred_check
      _
    $region19: #{tpu_custom_call.1} parent=1 // pred_check_branch
      %636 = sbr.rel (0) target = $region21
    $region20: #{tpu_custom_call.1} parent=1 // pred_region
      %637 = dma.done [#allocation4], 256
    $region21: #{tpu_custom_call.1} parent=1 // pred_fallthru
      _
    %638 = vsyncpa [#allocation3], 1
    %639 = vsyncpa [#allocation4], 1

</llo_original>
